<compile_context>
chip_gen: v6e
topology: v6e:2x2x1
jax: 0.10.0
libtpu: 0.0.40
codegen_flags: <defaults>
</compile_context>

<pallas_src>
import functools
import math

import jax
import jax.numpy as jnp
import numpy as np
from jax.experimental import pallas as pl
from jax.experimental.pallas import tpu as pltpu

FILTER_SIZES = (3, 4, 5)
MAX_FS = max(FILTER_SIZES)
LANE = 128


def _round_up(x, m):
    return ((x + m - 1) // m) * m


def _vanilla_conv_kernel(x_ref, w_ref, b_ref, m_ref, o_ref, *, tb, s_pad, n_pad):
    # x_ref : (TB*S_pad, E) bf16  -- TB docs, each zero-padded to S_pad rows, flattened.
    # w_ref : (MAX_FS, E, N_pad) bf16 -- fused conv weights, one tap per leading index.
    # b_ref : (1, N_pad) f32       -- fused bias (zeros in the padded lanes).
    # m_ref : (M_out, N_pad) f32   -- validity mask (zero where window is invalid).
    # o_ref : (TB, N_pad) f32      -- max-over-time pooled features per doc.
    x = x_ref[...]
    m_in = tb * s_pad
    m_out = m_in - (MAX_FS - 1)

    acc = jnp.zeros((m_out, n_pad), jnp.float32)
    for k in range(MAX_FS):  # conv as a sum of shifted wide matmuls (MXU, bf16 -> f32)
        acc = acc + jnp.dot(x[k:k + m_out, :], w_ref[k],
                            preferred_element_type=jnp.float32)
    acc = jnp.maximum(acc + b_ref[...], 0.0)   # bias + relu in f32
    acc = acc * m_ref[...]                     # zero cross-doc / padded-tap positions
    # restore the (TB, S_pad) segmentation and max-pool over time per doc
    acc = jnp.concatenate(
        [acc, jnp.zeros((MAX_FS - 1, n_pad), jnp.float32)], axis=0)
    acc = acc.reshape(tb, s_pad, n_pad)
    o_ref[...] = jnp.max(acc, axis=1)          # lane-dense (TB, 128) store


def vanilla_conv_forward(docs, weights, biases, *, tb=None):
    """docs: (B, S, E) float32 embedded tokens.
    weights: list of (fs, E, F); biases: list of (1, F). Returns (B, 3*F) float32."""
    B, S, E = docs.shape
    F_ = weights[0].shape[-1]
    n_real = len(FILTER_SIZES) * F_
    n_pad = max(LANE, _round_up(n_real, LANE))
    assert S >= MAX_FS, "sequence must be at least the largest filter size"

    # per-doc padded length; multiple of 8 keeps the in-kernel reshape layout-friendly
    s_pad = _round_up(S + MAX_FS - 1, 8)

    if tb is None:
        # batch tile: >=8 (sublane-dense output), <=128, sized so the double-buffered bf16
        # input slab + f32 accumulator + mask stay well inside scoped VMEM (v7x: 64 MiB).
        budget = 8 * 1024 * 1024
        per_doc = s_pad * (2 * E * 2 + 3 * n_pad * 4)
        tb = max(8, min(128, (budget // max(per_doc, 1)) // 8 * 8))
        tb = min(tb, _round_up(B, 8))
    b_pad = _round_up(B, tb)

    # ---- weight / bias packing (could be cached across calls) ----
    w_parts, b_parts = [], []
    for fs, w, b in zip(FILTER_SIZES, weights, biases):
        w_parts.append(jnp.pad(w, ((0, MAX_FS - fs), (0, 0), (0, 0))))  # zero missing taps
        b_parts.append(b.reshape(1, F_))
    w_fused = jnp.pad(jnp.concatenate(w_parts, axis=-1),
                      ((0, 0), (0, 0), (0, n_pad - n_real))).astype(jnp.bfloat16)
    b_fused = jnp.pad(jnp.concatenate(b_parts, axis=-1).astype(jnp.float32),
                      ((0, 0), (0, n_pad - n_real)))

    # validity mask over conv positions inside one batch tile
    m_in = tb * s_pad
    m_out = m_in - (MAX_FS - 1)
    pos = np.arange(m_out) % s_pad
    mask = np.zeros((m_out, n_pad), np.float32)
    for g, fs in enumerate(FILTER_SIZES):
        mask[:, g * F_:(g + 1) * F_] = (pos < (S - fs + 1))[:, None].astype(np.float32)
    mask = jnp.asarray(mask)

    # pad docs to (B_pad, S_pad, E), cast to bf16 (halves HBM traffic), flatten rows
    x = jnp.pad(docs, ((0, b_pad - B), (0, s_pad - S), (0, 0))).astype(jnp.bfloat16)
    x = x.reshape(b_pad * s_pad, E)

    kernel = functools.partial(_vanilla_conv_kernel, tb=tb, s_pad=s_pad, n_pad=n_pad)

    out = pl.pallas_call(
        kernel,
        out_shape=jax.ShapeDtypeStruct((b_pad, n_pad), jnp.float32),
        grid_spec=pltpu.PrefetchScalarGridSpec(
            num_scalar_prefetch=0,
            grid=(b_pad // tb,),
            in_specs=[
                pl.BlockSpec((m_in, E), lambda i: (i, 0)),              # streamed doc slab
                pl.BlockSpec((MAX_FS, E, n_pad), lambda i: (0, 0, 0)),  # fused weights
                pl.BlockSpec((1, n_pad), lambda i: (0, 0)),             # fused bias
                pl.BlockSpec((m_out, n_pad), lambda i: (0, 0)),         # validity mask
            ],
            out_specs=pl.BlockSpec((tb, n_pad), lambda i: (i, 0)),
        ),
        compiler_params=pltpu.CompilerParams(
            dimension_semantics=("parallel",),        # batch tiles independent (2 TCs on v7x)
            vmem_limit_bytes=48 * 1024 * 1024,        # explicit, safe on v7x's 64 MiB VMEM
        ),
    )(x, w_fused, b_fused, mask)
    return out[:B, :n_real]


def xavier_uniform(key, shape, fan_in, fan_out, dtype=jnp.float32):
    bound = math.sqrt(6.0 / (fan_in + fan_out))
    return jax.random.uniform(key, shape, dtype, minval=-bound, maxval=bound)


if __name__ == "__main__":
    batch, seq = 2, 16
    vocab_size = 50
    emb_size = 32          # args.cnn_embedding_size
    filter_num = 8         # args.num_filter_maps
    # args.dropout_rate irrelevant at eval time (dropout == identity)

    key = jax.random.PRNGKey(0)
    k_emb, k_x, *k_ws = jax.random.split(key, 2 + 2 * len(FILTER_SIZES))

    embed_table = jax.random.normal(k_emb, (vocab_size, emb_size), jnp.float32) * 0.1
    token_ids = jax.random.randint(k_x, (batch, seq), 0, vocab_size)

    # Conv2d(1, F, (fs, E)) weights stored as (fs, E, F) for the kernel's matmul form.
    weights, biases = [], []
    for i, fs in enumerate(FILTER_SIZES):
        fan_in = 1 * fs * emb_size
        fan_out = filter_num * fs * emb_size
        w = xavier_uniform(k_ws[2 * i], (fs, emb_size, filter_num), fan_in, fan_out)
        b = jax.random.uniform(k_ws[2 * i + 1], (1, filter_num), jnp.float32,
                               minval=-0.05, maxval=0.05)
        weights.append(w)
        biases.append(b)

    # Embedding lookup (gather) stays in plain JAX.
    # TODO(synk): for large B*S fuse this gather into the kernel (scalar-prefetched ids +
    # memory_space=pl.ANY embedding table) to cut the docs HBM round trip.
    docs = jnp.take(embed_table, token_ids, axis=0)   # (B, S, E) f32

    out = vanilla_conv_forward(docs, weights, biases)  # (B, 3*F) = (2, 24)
    jax.block_until_ready(out)

    # Pure-JAX reference of the same math (same bf16 matmul inputs, f32 accumulation).
    def ref(d):
        d16 = d.astype(jnp.bfloat16)
        feats = []
        for fs, w, b in zip(FILTER_SIZES, weights, biases):
            l_out = seq - fs + 1
            acc = jnp.zeros((batch, l_out, filter_num), jnp.float32)
            w16 = w.astype(jnp.bfloat16)
            for k in range(fs):
                acc = acc + jnp.einsum("bte,ef->btf", d16[:, k:k + l_out, :], w16[k],
                                       preferred_element_type=jnp.float32)
            acc = jnp.maximum(acc + b[0], 0.0)
            feats.append(jnp.max(acc, axis=1))
        return jnp.concatenate(feats, axis=1)

    expected = ref(docs)
    assert out.shape == (batch, len(FILTER_SIZES) * filter_num)
    assert jnp.allclose(out, expected, atol=1e-4, rtol=1e-4), \
        float(jnp.max(jnp.abs(out - expected)))
    print("KERNEL_OK")
</pallas_src>

<mosaic_0001>
module attributes {stable_mosaic.version = 11 : i64} {
  func.func @_vanilla_conv_kernel(%arg0: i32, %arg1: memref<192x32xbf16, #tpu.memory_space<vmem>>, %arg2: memref<5x32x128xbf16, #tpu.memory_space<vmem>>, %arg3: memref<1x128xf32, #tpu.memory_space<vmem>>, %arg4: memref<188x128xf32, #tpu.memory_space<vmem>>, %arg5: memref<8x128xf32, #tpu.memory_space<vmem>>) attributes {dimension_semantics = [#tpu.dimension_semantics<parallel>], iteration_bounds = array<i64: 1>, scalar_prefetch = 0 : i64, scratch_operands = 0 : i64, tpu.core_type = #tpu.core_type<tc>, window_params = [{transform_indices = @transform_0, window_bounds = array<i64: 192, 32>}, {pipeline_mode = #tpu.pipeline_mode<synchronous>, transform_indices = @transform_1, window_bounds = array<i64: 5, 32, 128>}, {pipeline_mode = #tpu.pipeline_mode<synchronous>, transform_indices = @transform_2, window_bounds = array<i64: 1, 128>}, {pipeline_mode = #tpu.pipeline_mode<synchronous>, transform_indices = @transform_3, window_bounds = array<i64: 188, 128>}, {transform_indices = @transform_4, window_bounds = array<i64: 8, 128>}]} {
    %c0 = arith.constant 0 : index
    %c0_0 = arith.constant 0 : index
    %0 = vector.load %arg1[%c0, %c0_0] : memref<192x32xbf16, #tpu.memory_space<vmem>>, vector<192x32xbf16>
    %cst = arith.constant 0.000000e+00 : f32
    %1 = vector.broadcast %cst : f32 to vector<188x128xf32>
    %2 = vector.extract_strided_slice %0 {offsets = [0, 0], sizes = [188, 32], strides = [1, 1]} : vector<192x32xbf16> to vector<188x32xbf16>
    %c0_1 = arith.constant 0 : index
    %c0_2 = arith.constant 0 : index
    %c0_3 = arith.constant 0 : index
    %3 = vector.load %arg2[%c0_1, %c0_2, %c0_3] : memref<5x32x128xbf16, #tpu.memory_space<vmem>>, vector<1x32x128xbf16>
    %4 = vector.shape_cast %3 : vector<1x32x128xbf16> to vector<32x128xbf16>
    %cst_4 = arith.constant dense<0.000000e+00> : vector<188x128xf32>
    %5 = tpu.matmul %2, %4, %cst_4 {dimension_numbers = #tpu.dot_dimension_numbers<[1], [0], [0], [1], [0, 0, 1, 1], [], []>} : vector<188x32xbf16>, vector<32x128xbf16>, vector<188x128xf32> -> vector<188x128xf32>
    %6 = arith.addf %1, %5 : vector<188x128xf32>
    %7 = vector.extract_strided_slice %0 {offsets = [1, 0], sizes = [188, 32], strides = [1, 1]} : vector<192x32xbf16> to vector<188x32xbf16>
    %c1 = arith.constant 1 : index
    %c0_5 = arith.constant 0 : index
    %c0_6 = arith.constant 0 : index
    %8 = vector.load %arg2[%c1, %c0_5, %c0_6] : memref<5x32x128xbf16, #tpu.memory_space<vmem>>, vector<1x32x128xbf16>
    %9 = vector.shape_cast %8 : vector<1x32x128xbf16> to vector<32x128xbf16>
    %cst_7 = arith.constant dense<0.000000e+00> : vector<188x128xf32>
    %10 = tpu.matmul %7, %9, %cst_7 {dimension_numbers = #tpu.dot_dimension_numbers<[1], [0], [0], [1], [0, 0, 1, 1], [], []>} : vector<188x32xbf16>, vector<32x128xbf16>, vector<188x128xf32> -> vector<188x128xf32>
    %11 = arith.addf %6, %10 : vector<188x128xf32>
    %12 = vector.extract_strided_slice %0 {offsets = [2, 0], sizes = [188, 32], strides = [1, 1]} : vector<192x32xbf16> to vector<188x32xbf16>
    %c2 = arith.constant 2 : index
    %c0_8 = arith.constant 0 : index
    %c0_9 = arith.constant 0 : index
    %13 = vector.load %arg2[%c2, %c0_8, %c0_9] : memref<5x32x128xbf16, #tpu.memory_space<vmem>>, vector<1x32x128xbf16>
    %14 = vector.shape_cast %13 : vector<1x32x128xbf16> to vector<32x128xbf16>
    %cst_10 = arith.constant dense<0.000000e+00> : vector<188x128xf32>
    %15 = tpu.matmul %12, %14, %cst_10 {dimension_numbers = #tpu.dot_dimension_numbers<[1], [0], [0], [1], [0, 0, 1, 1], [], []>} : vector<188x32xbf16>, vector<32x128xbf16>, vector<188x128xf32> -> vector<188x128xf32>
    %16 = arith.addf %11, %15 : vector<188x128xf32>
    %17 = vector.extract_strided_slice %0 {offsets = [3, 0], sizes = [188, 32], strides = [1, 1]} : vector<192x32xbf16> to vector<188x32xbf16>
    %c3 = arith.constant 3 : index
    %c0_11 = arith.constant 0 : index
    %c0_12 = arith.constant 0 : index
    %18 = vector.load %arg2[%c3, %c0_11, %c0_12] : memref<5x32x128xbf16, #tpu.memory_space<vmem>>, vector<1x32x128xbf16>
    %19 = vector.shape_cast %18 : vector<1x32x128xbf16> to vector<32x128xbf16>
    %cst_13 = arith.constant dense<0.000000e+00> : vector<188x128xf32>
    %20 = tpu.matmul %17, %19, %cst_13 {dimension_numbers = #tpu.dot_dimension_numbers<[1], [0], [0], [1], [0, 0, 1, 1], [], []>} : vector<188x32xbf16>, vector<32x128xbf16>, vector<188x128xf32> -> vector<188x128xf32>
    %21 = arith.addf %16, %20 : vector<188x128xf32>
    %22 = vector.extract_strided_slice %0 {offsets = [4, 0], sizes = [188, 32], strides = [1, 1]} : vector<192x32xbf16> to vector<188x32xbf16>
    %c4 = arith.constant 4 : index
    %c0_14 = arith.constant 0 : index
    %c0_15 = arith.constant 0 : index
    %23 = vector.load %arg2[%c4, %c0_14, %c0_15] : memref<5x32x128xbf16, #tpu.memory_space<vmem>>, vector<1x32x128xbf16>
    %24 = vector.shape_cast %23 : vector<1x32x128xbf16> to vector<32x128xbf16>
    %cst_16 = arith.constant dense<0.000000e+00> : vector<188x128xf32>
    %25 = tpu.matmul %22, %24, %cst_16 {dimension_numbers = #tpu.dot_dimension_numbers<[1], [0], [0], [1], [0, 0, 1, 1], [], []>} : vector<188x32xbf16>, vector<32x128xbf16>, vector<188x128xf32> -> vector<188x128xf32>
    %26 = arith.addf %21, %25 : vector<188x128xf32>
    %c0_17 = arith.constant 0 : index
    %c0_18 = arith.constant 0 : index
    %27 = vector.load %arg3[%c0_17, %c0_18] : memref<1x128xf32, #tpu.memory_space<vmem>>, vector<1x128xf32>
    %28 = vector.broadcast %27 : vector<1x128xf32> to vector<188x128xf32>
    %29 = arith.addf %26, %28 : vector<188x128xf32>
    %cst_19 = arith.constant 0.000000e+00 : f32
    %30 = vector.broadcast %cst_19 : f32 to vector<188x128xf32>
    %31 = arith.maximumf %29, %30 : vector<188x128xf32>
    %c0_20 = arith.constant 0 : index
    %c0_21 = arith.constant 0 : index
    %32 = vector.load %arg4[%c0_20, %c0_21] : memref<188x128xf32, #tpu.memory_space<vmem>>, vector<188x128xf32>
    %33 = arith.mulf %31, %32 : vector<188x128xf32>
    %cst_22 = arith.constant 0.000000e+00 : f32
    %34 = vector.broadcast %cst_22 : f32 to vector<4x128xf32>
    %35 = tpu.concatenate %33, %34 in 0 : vector<188x128xf32>, vector<4x128xf32> -> vector<192x128xf32>
    %36 = vector.shape_cast %35 : vector<192x128xf32> to vector<8x24x128xf32>
    %cst_23 = arith.constant dense<0xFF800000> : vector<8x128xf32>
    %37 = vector.multi_reduction <maximumf>, %36, %cst_23 [1] : vector<8x24x128xf32> to vector<8x128xf32>
    %c0_24 = arith.constant 0 : index
    %c0_25 = arith.constant 0 : index
    %38 = vector.load %arg5[%c0_24, %c0_25] : memref<8x128xf32, #tpu.memory_space<vmem>>, vector<8x128xf32>
    tpu.vector_store %arg5[%c0_24, %c0_25], %37 {strides = array<i32>} : memref<8x128xf32, #tpu.memory_space<vmem>>, vector<8x128xf32>,
    return
  }
  func.func @transform_0(%arg0: i32) -> (i32, i32) {
    %c0_i32 = arith.constant 0 : i32
    %c0_i32_0 = arith.constant 0 : i32
    return %arg0, %c0_i32 : i32, i32
  }
  func.func @transform_1(%arg0: i32) -> (i32, i32, i32) {
    %c0_i32 = arith.constant 0 : i32
    %c0_i32_0 = arith.constant 0 : i32
    %c0_i32_1 = arith.constant 0 : i32
    %c0_i32_2 = arith.constant 0 : i32
    return %c0_i32, %c0_i32_0, %c0_i32_1 : i32, i32, i32
  }
  func.func @transform_2(%arg0: i32) -> (i32, i32) {
    %c0_i32 = arith.constant 0 : i32
    %c0_i32_0 = arith.constant 0 : i32
    %c0_i32_1 = arith.constant 0 : i32
    return %c0_i32, %c0_i32_0 : i32, i32
  }
  func.func @transform_3(%arg0: i32) -> (i32, i32) {
    %c0_i32 = arith.constant 0 : i32
    %c0_i32_0 = arith.constant 0 : i32
    %c0_i32_1 = arith.constant 0 : i32
    return %c0_i32, %c0_i32_0 : i32, i32
  }
  func.func @transform_4(%arg0: i32) -> (i32, i32) {
    %c0_i32 = arith.constant 0 : i32
    %c0_i32_0 = arith.constant 0 : i32
    return %arg0, %c0_i32 : i32, i32
  }
}

</mosaic_0001>

<llo_original>
// kernel: tpu_custom_call.1
$region0: #{tpu_custom_call.1}
  #allocation0 [shape = 'u32[]', space=smem, size = 0x4, offset = 0x4, fixed_abs, tag = 'smem constant byte address 0x4 - core index']
  #allocation1 [shape = 'u32[144,128]{1,0:T(1,128)}', space=vmem, size = 0x12000, scoped, tag = 'internal scratch']
  %s0 = inlined_call_operand.vmem [shape: bf16[192,32], index: 0, kind: input, shape index: {}]
  %s1 = inlined_call_operand.vmem [shape: bf16[5,32,128], index: 1, kind: input, shape index: {}]
  %s2 = inlined_call_operand.vmem [shape: f32[1,128], index: 2, kind: input, shape index: {}]
  %s3 = inlined_call_operand.hbm [shape: f32[188,128], index: 3, kind: input, shape index: {}]
  %s4 = inlined_call_operand.hbm [shape: f32[8,128], index: 4, kind: output, shape index: {}]
  %s5 = sld [smem:[#allocation0]]
  $region30: #{tpu_custom_call.1} parent=0
    _
  %s7 = ssub.s32 1, %s5
  %s8 = scalar_select 0, %s7, %s5
  $region1: #{tpu_custom_call.1} parent=0
    #allocation2 [shape = 'u8[98304]{0}', space=vmem, size = 0x18000, scoped, tag = 'input window, operand 3, single buffered']
    #allocation3 [shape = 's32[1]{0}', space=sflag, size = 0x4, scoped, tag = 'scoped memory for tpu_custom_call.1']
    #allocation4 [shape = 's32[1]{0}', space=sflag, size = 0x4, scoped, tag = 'scoped memory for tpu_custom_call.1']
    #allocation5 [shape = 'u8[4096]{0}', space=vmem, size = 0x1000, scoped, tag = 'output window, operand 0, single buffered']
    %9 = vsyncpa [#allocation3], 0
    %10 = vsyncpa [#allocation4], 0
    // Predicated region
    $region2: #{tpu_custom_call.1} parent=1 // pred_check
      _
    $region3: #{tpu_custom_call.1} parent=1 // pred_check_branch
      %12 = sbr.rel (0) target = $region5
    $region4: #{tpu_custom_call.1} parent=1 // pred_region
      _
    $region5: #{tpu_custom_call.1} parent=1 // pred_fallthru
      _
    // Predicated region
    $region6: #{tpu_custom_call.1} parent=1 // pred_check
      _
    $region7: #{tpu_custom_call.1} parent=1 // pred_check_branch
      %14 = sbr.rel (0) target = $region9
    $region8: #{tpu_custom_call.1} parent=1 // pred_region
      _
    $region9: #{tpu_custom_call.1} parent=1 // pred_fallthru
      _
    // Predicated region
    $region10: #{tpu_custom_call.1} parent=1 // pred_check
      _
    $region11: #{tpu_custom_call.1} parent=1 // pred_check_branch
      %16 = sbr.rel (0) target = $region13
    $region12: #{tpu_custom_call.1} parent=1 // pred_region
      _
    $region13: #{tpu_custom_call.1} parent=1 // pred_fallthru
      _
    // Predicated region
    $region14: #{tpu_custom_call.1} parent=1 // pred_check
      _
    $region15: #{tpu_custom_call.1} parent=1 // pred_check_branch
      %18 = sbr.rel (0) target = $region17
    $region16: #{tpu_custom_call.1} parent=1 // pred_region
      %s20 = ssub.s32 3072, 3072
      %21 = vsyncadd [#allocation3], %s20
      %s22 = sshll.u32 [#allocation2], 4
      %s23 = int_to_ptr.vmem [resolvable:$true] %s22
      %28 = dma.hbm_to_vmem [thread:$0]  %s3, 3072, %s23, [#allocation3], 128, 128, 8
    $region17: #{tpu_custom_call.1} parent=1 // pred_fallthru
      _
    // Predicated region
    $region18: #{tpu_custom_call.1} parent=1 // pred_check
      _
    $region19: #{tpu_custom_call.1} parent=1 // pred_check_branch
      %30 = sbr.rel (0) target = $region21
    $region20: #{tpu_custom_call.1} parent=1 // pred_region
      %31 = dma.done [#allocation3], 3072
    $region21: #{tpu_custom_call.1} parent=1 // pred_fallthru
      _
    %v33 = vld [vmem:[%s0] sm:$0xf]
    %v34 = vld [vmem:[%s0 + $0x4] sm:$0xf]
    %v35 = vld [vmem:[%s0 + $0x8] sm:$0xf]
    %v36 = vld [vmem:[%s0 + $0xc] sm:$0xf]
    %v37 = vld [vmem:[%s0 + $0x10] sm:$0xf]
    %v38 = vld [vmem:[%s0 + $0x14] sm:$0xf]
    %v39 = vld [vmem:[%s0 + $0x18] sm:$0xf]
    %v40 = vld [vmem:[%s0 + $0x1c] sm:$0xf]
    %v41 = vld [vmem:[%s0 + $0x20] sm:$0xf]
    %v42 = vld [vmem:[%s0 + $0x24] sm:$0xf]
    %v43 = vld [vmem:[%s0 + $0x28] sm:$0xf]
    %v44 = vld [vmem:[%s0 + $0x2c] sm:$0xf]
    %v45 = vld [vmem:[%s0 + $0x30] sm:$0xf]
    %v46 = vld [vmem:[%s0 + $0x34] sm:$0xf]
    %v47 = vld [vmem:[%s0 + $0x38] sm:$0xf]
    %v48 = vld [vmem:[%s0 + $0x3c] sm:$0xf]
    %v49 = vld [vmem:[%s0 + $0x40] sm:$0xf]
    %v50 = vld [vmem:[%s0 + $0x44] sm:$0xf]
    %v51 = vld [vmem:[%s0 + $0x48] sm:$0xf]
    %v52 = vld [vmem:[%s0 + $0x4c] sm:$0xf]
    %v53 = vld [vmem:[%s0 + $0x50] sm:$0xf]
    %v54 = vld [vmem:[%s0 + $0x54] sm:$0xf]
    %v55 = vld [vmem:[%s0 + $0x58] sm:$0xf]
    %v56 = vld [vmem:[%s0 + $0x5c] sm:$0xf]
    %v57 = vld [vmem:[%s1] sm:$0xf]
    %v58 = vld [vmem:[%s1 + $0x4] sm:$0xf]
    %v59 = vld [vmem:[%s1 + $0x8] sm:$0xf]
    %v60 = vld [vmem:[%s1 + $0xc] sm:$0xf]
    %s61 = scalar_lea.vmem %s1, 16
    %v62 = vld [vmem:[%s61] sm:$0xf]
    %v63 = vld [vmem:[%s61 + $0x4] sm:$0xf]
    %v64 = vld [vmem:[%s61 + $0x8] sm:$0xf]
    %v65 = vld [vmem:[%s61 + $0xc] sm:$0xf]
    %v90 = vunpack.c.l.b16 %v33
    %v91 = vunpack.c.l.b16 %v34
    %v92 = vunpack.c.l.b16 %v35
    %v93 = vunpack.c.l.b16 %v36
    %v94 = vunpack.c.l.b16 %v37
    %v95 = vunpack.c.l.b16 %v38
    %v96 = vunpack.c.l.b16 %v39
    %v97 = vunpack.c.l.b16 %v40
    %v98 = vunpack.c.l.b16 %v41
    %v99 = vunpack.c.l.b16 %v42
    %v100 = vunpack.c.l.b16 %v43
    %v101 = vunpack.c.l.b16 %v44
    %v102 = vunpack.c.l.b16 %v45
    %v103 = vunpack.c.l.b16 %v46
    %v104 = vunpack.c.l.b16 %v47
    %v105 = vunpack.c.l.b16 %v48
    %v106 = vunpack.c.l.b16 %v49
    %v107 = vunpack.c.l.b16 %v50
    %v108 = vunpack.c.l.b16 %v51
    %v109 = vunpack.c.l.b16 %v52
    %v110 = vunpack.c.l.b16 %v53
    %v111 = vunpack.c.l.b16 %v54
    %v112 = vunpack.c.l.b16 %v55
    %v113 = vunpack.c.l.b16 %v56
    %v114 = vpack.c.b16 %v91, %v90
    %v115 = vpack.c.b16 %v93, %v92
    %v116 = vpack.c.b16 %v95, %v94
    %v117 = vpack.c.b16 %v97, %v96
    %v118 = vpack.c.b16 %v99, %v98
    %v119 = vpack.c.b16 %v101, %v100
    %v120 = vpack.c.b16 %v103, %v102
    %v121 = vpack.c.b16 %v105, %v104
    %v122 = vpack.c.b16 %v107, %v106
    %v123 = vpack.c.b16 %v109, %v108
    %v124 = vpack.c.b16 %v111, %v110
    %v125 = vpack.c.b16 %v113, %v112
    %vm126 = vsmask.f32 7424
    %v128 = vshrl.u32 %v114, 16
    %v130 = vshll.u32 %v114, 16
    %v132 = vrot.slane %v130, 1
    %v133 = vor.u32 %v128, %v132
    %v135 = vshll.u32 %v115, 16
    %v137 = vrot.slane %v135, 1
    %v138 = vsel %vm126, %v133, %v137
    %v139 = vshrl.u32 %v115, 16
    %v141 = vor.u32 %v139, %v137
    %v143 = vshll.u32 %v116, 16
    %v145 = vrot.slane %v143, 1
    %v146 = vsel %vm126, %v141, %v145
    %v147 = vshrl.u32 %v116, 16
    %v149 = vor.u32 %v147, %v145
    %v151 = vshll.u32 %v117, 16
    %v153 = vrot.slane %v151, 1
    %v154 = vsel %vm126, %v149, %v153
    %v155 = vshrl.u32 %v117, 16
    %v157 = vor.u32 %v155, %v153
    %v159 = vshll.u32 %v118, 16
    %v161 = vrot.slane %v159, 1
    %v162 = vsel %vm126, %v157, %v161
    %v163 = vshrl.u32 %v118, 16
    %v165 = vor.u32 %v163, %v161
    %v167 = vshll.u32 %v119, 16
    %v169 = vrot.slane %v167, 1
    %v170 = vsel %vm126, %v165, %v169
    %v171 = vshrl.u32 %v119, 16
    %v173 = vor.u32 %v171, %v169
    %v175 = vshll.u32 %v120, 16
    %v177 = vrot.slane %v175, 1
    %v178 = vsel %vm126, %v173, %v177
    %v179 = vshrl.u32 %v120, 16
    %v181 = vor.u32 %v179, %v177
    %v183 = vshll.u32 %v121, 16
    %v185 = vrot.slane %v183, 1
    %v186 = vsel %vm126, %v181, %v185
    %v187 = vshrl.u32 %v121, 16
    %v189 = vor.u32 %v187, %v185
    %v191 = vshll.u32 %v122, 16
    %v193 = vrot.slane %v191, 1
    %v194 = vsel %vm126, %v189, %v193
    %v195 = vshrl.u32 %v122, 16
    %v197 = vor.u32 %v195, %v193
    %v199 = vshll.u32 %v123, 16
    %v201 = vrot.slane %v199, 1
    %v202 = vsel %vm126, %v197, %v201
    %v203 = vshrl.u32 %v123, 16
    %v205 = vor.u32 %v203, %v201
    %v207 = vshll.u32 %v124, 16
    %v209 = vrot.slane %v207, 1
    %v210 = vsel %vm126, %v205, %v209
    %v211 = vshrl.u32 %v124, 16
    %v213 = vor.u32 %v211, %v209
    %v215 = vshll.u32 %v125, 16
    %v217 = vrot.slane %v215, 1
    %v218 = vsel %vm126, %v213, %v217
    %v219 = vshrl.u32 %v125, 16
    %v221 = vor.u32 %v219, %v217
    %v226 = vunpack.c.l.b16 %v62
    %v227 = vunpack.c.l.b16 %v63
    %v228 = vunpack.c.l.b16 %v64
    %v229 = vunpack.c.l.b16 %v65
    %v230 = vpack.c.b16 %v227, %v226
    %v231 = vpack.c.b16 %v229, %v228
    %vm234 = vcmask 261120
    %v236 = vsel %vm234, %v138, 0
    %v239 = vsel %vm234, %v146, 0
    %v242 = vsel %vm234, %v154, 0
    %v245 = vsel %vm234, %v162, 0
    %v248 = vsel %vm234, %v170, 0
    %v251 = vsel %vm234, %v178, 0
    %v254 = vsel %vm234, %v186, 0
    %v257 = vsel %vm234, %v194, 0
    %v260 = vsel %vm234, %v202, 0
    %v263 = vsel %vm234, %v210, 0
    %v266 = vsel %vm234, %v218, 0
    %v269 = vsel %vm234, %v221, 0
    %271 = vmatprep.subr.bf16.mxu0 0
    %272 = vmatpush1.bf16.msra.mxu0 0
    %273 = vmatprep.subr.bf16.mxu0 0
    %274 = vmatpush1.bf16.msra.mxu0 0
    %275 = vmatprep.subr.bf16.mxu0 0
    %276 = vmatpush1.bf16.msra.mxu0 0
    %277 = vmatprep.subr.bf16.mxu0 0
    %278 = vmatpush1.bf16.msra.mxu0 0
    %279 = vmatprep.subr.bf16.mxu0 0
    %280 = vmatpush1.bf16.msra.mxu0 0
    %281 = vmatprep.subr.bf16.mxu0 0
    %282 = vmatpush1.bf16.msra.mxu0 0
    %283 = vmatprep.subr.bf16.mxu0 0
    %284 = vmatpush1.bf16.msra.mxu0 %v231
    %285 = vmatprep.subr.bf16.mxu0 0
    %286 = vmatpush1.bf16.msra.mxu0 %v230
    %287 = vmatprep.subr.bf16.mxu0 0
    %288 = vmatpush2.bf16.msra.mxu0 0
    %289 = vmatprep.subr.bf16.mxu0 0
    %290 = vmatpush2.bf16.msra.mxu0 0
    %291 = vmatprep.subr.bf16.mxu0 0
    %292 = vmatpush2.bf16.msra.mxu0 0
    %293 = vmatprep.subr.bf16.mxu0 0
    %294 = vmatpush2.bf16.msra.mxu0 0
    %295 = vmatprep.subr.bf16.mxu0 0
    %296 = vmatpush2.bf16.msra.mxu0 0
    %297 = vmatprep.subr.bf16.mxu0 0
    %298 = vmatpush2.bf16.msra.mxu0 0
    %299 = vmatprep.subr.bf16.mxu0 0
    %300 = vmatpush2.bf16.msra.mxu0 0
    %301 = vmatprep.subr.bf16.mxu0 0
    %302 = vmatpush2.bf16.msra.mxu0 0
    %303 = vmatprep.mubr.bf16.mxu0 0
    %304 = vmatmul.mubr.bf16.gmra.mxu0 %v236
    %v305 = vpop.f32.mrf.mxu0
    %v306 = vadd.f32 0.0, %v305
    %v307 = vpop.f32.mrf.mxu0
    %v308 = vpop.f32.mrf.mxu0
    %v309 = vadd.f32 0.0, %v308
    %v310 = vpop.f32.mrf.mxu0
    %311 = vmatprep.mubr.bf16.mxu0 0
    %312 = vmatmul.mubr.bf16.gmra.mxu0 %v239
    %v313 = vpop.f32.mrf.mxu0
    %v314 = vadd.f32 0.0, %v313
    %v315 = vpop.f32.mrf.mxu0
    %v316 = vpop.f32.mrf.mxu0
    %v317 = vadd.f32 0.0, %v316
    %v318 = vpop.f32.mrf.mxu0
    %319 = vmatprep.mubr.bf16.mxu0 0
    %320 = vmatmul.mubr.bf16.gmra.mxu0 %v242
    %v321 = vpop.f32.mrf.mxu0
    %v322 = vadd.f32 0.0, %v321
    %v323 = vpop.f32.mrf.mxu0
    %v324 = vpop.f32.mrf.mxu0
    %v325 = vadd.f32 0.0, %v324
    %v326 = vpop.f32.mrf.mxu0
    %327 = vmatprep.mubr.bf16.mxu0 0
    %328 = vmatmul.mubr.bf16.gmra.mxu0 %v245
    %v329 = vpop.f32.mrf.mxu0
    %v330 = vadd.f32 0.0, %v329
    %v331 = vpop.f32.mrf.mxu0
    %v332 = vpop.f32.mrf.mxu0
    %v333 = vadd.f32 0.0, %v332
    %v334 = vpop.f32.mrf.mxu0
    %335 = vmatprep.mubr.bf16.mxu0 0
    %336 = vmatmul.mubr.bf16.gmra.mxu0 %v248
    %v337 = vpop.f32.mrf.mxu0
    %v338 = vadd.f32 0.0, %v337
    %v339 = vpop.f32.mrf.mxu0
    %v340 = vpop.f32.mrf.mxu0
    %v341 = vadd.f32 0.0, %v340
    %v342 = vpop.f32.mrf.mxu0
    %343 = vmatprep.mubr.bf16.mxu0 0
    %344 = vmatmul.mubr.bf16.gmra.mxu0 %v251
    %v345 = vpop.f32.mrf.mxu0
    %v346 = vadd.f32 0.0, %v345
    %v347 = vpop.f32.mrf.mxu0
    %v348 = vpop.f32.mrf.mxu0
    %v349 = vadd.f32 0.0, %v348
    %v350 = vpop.f32.mrf.mxu0
    %351 = vmatprep.mubr.bf16.mxu0 0
    %352 = vmatmul.mubr.bf16.gmra.mxu0 %v254
    %v353 = vpop.f32.mrf.mxu0
    %v354 = vadd.f32 0.0, %v353
    %v355 = vpop.f32.mrf.mxu0
    %v356 = vpop.f32.mrf.mxu0
    %v357 = vadd.f32 0.0, %v356
    %v358 = vpop.f32.mrf.mxu0
    %359 = vmatprep.mubr.bf16.mxu0 0
    %360 = vmatmul.mubr.bf16.gmra.mxu0 %v257
    %v361 = vpop.f32.mrf.mxu0
    %v362 = vadd.f32 0.0, %v361
    %v363 = vpop.f32.mrf.mxu0
    %v364 = vpop.f32.mrf.mxu0
    %v365 = vadd.f32 0.0, %v364
    %v366 = vpop.f32.mrf.mxu0
    %367 = vmatprep.mubr.bf16.mxu0 0
    %368 = vmatmul.mubr.bf16.gmra.mxu0 %v260
    %v369 = vpop.f32.mrf.mxu0
    %v370 = vadd.f32 0.0, %v369
    %v371 = vpop.f32.mrf.mxu0
    %v372 = vpop.f32.mrf.mxu0
    %v373 = vadd.f32 0.0, %v372
    %v374 = vpop.f32.mrf.mxu0
    %375 = vmatprep.mubr.bf16.mxu0 0
    %376 = vmatmul.mubr.bf16.gmra.mxu0 %v263
    %v377 = vpop.f32.mrf.mxu0
    %v378 = vadd.f32 0.0, %v377
    %v379 = vpop.f32.mrf.mxu0
    %v380 = vpop.f32.mrf.mxu0
    %v381 = vadd.f32 0.0, %v380
    %v382 = vpop.f32.mrf.mxu0
    %383 = vmatprep.mubr.bf16.mxu0 0
    %384 = vmatmul.mubr.bf16.gmra.mxu0 %v266
    %v385 = vpop.f32.mrf.mxu0
    %v386 = vadd.f32 0.0, %v385
    %v387 = vpop.f32.mrf.mxu0
    %v388 = vpop.f32.mrf.mxu0
    %v389 = vadd.f32 0.0, %v388
    %v390 = vpop.f32.mrf.mxu0
    %391 = vmatprep.mubr.bf16.mxu0 0
    %392 = vmatmul.mubr.bf16.gmra.mxu0 %v269
    %v393 = vpop.f32.mrf.mxu0
    %v394 = vadd.f32 0.0, %v393
    %v395 = vpop.f32.mrf.mxu0
    %v396 = vpop.f32.mrf.mxu0
    %v397 = vadd.f32 0.0, %v396
    %v398 = vpop.f32.mrf.mxu0
    %399 = vdwg.mxu0
    %v404 = vunpack.c.l.b16 %v57
    %v405 = vunpack.c.l.b16 %v58
    %v406 = vunpack.c.l.b16 %v59
    %v407 = vunpack.c.l.b16 %v60
    %v408 = vpack.c.b16 %v405, %v404
    %v409 = vpack.c.b16 %v407, %v406
    %v412 = vsel %vm234, %v114, 0
    %v414 = vsel %vm234, %v115, 0
    %v416 = vsel %vm234, %v116, 0
    %v418 = vsel %vm234, %v117, 0
    %v420 = vsel %vm234, %v118, 0
    %v422 = vsel %vm234, %v119, 0
    %v424 = vsel %vm234, %v120, 0
    %v426 = vsel %vm234, %v121, 0
    %v428 = vsel %vm234, %v122, 0
    %v430 = vsel %vm234, %v123, 0
    %v432 = vsel %vm234, %v124, 0
    %v434 = vsel %vm234, %v125, 0
    %436 = vmatprep.subr.bf16.mxu0 0
    %437 = vmatpush1.bf16.msra.mxu0 0
    %438 = vmatprep.subr.bf16.mxu0 0
    %439 = vmatpush1.bf16.msra.mxu0 0
    %440 = vmatprep.subr.bf16.mxu0 0
    %441 = vmatpush1.bf16.msra.mxu0 0
    %442 = vmatprep.subr.bf16.mxu0 0
    %443 = vmatpush1.bf16.msra.mxu0 0
    %444 = vmatprep.subr.bf16.mxu0 0
    %445 = vmatpush1.bf16.msra.mxu0 0
    %446 = vmatprep.subr.bf16.mxu0 0
    %447 = vmatpush1.bf16.msra.mxu0 0
    %448 = vmatprep.subr.bf16.mxu0 0
    %449 = vmatpush1.bf16.msra.mxu0 %v409
    %450 = vmatprep.subr.bf16.mxu0 0
    %451 = vmatpush1.bf16.msra.mxu0 %v408
    %452 = vmatprep.subr.bf16.mxu0 0
    %453 = vmatpush2.bf16.msra.mxu0 0
    %454 = vmatprep.subr.bf16.mxu0 0
    %455 = vmatpush2.bf16.msra.mxu0 0
    %456 = vmatprep.subr.bf16.mxu0 0
    %457 = vmatpush2.bf16.msra.mxu0 0
    %458 = vmatprep.subr.bf16.mxu0 0
    %459 = vmatpush2.bf16.msra.mxu0 0
    %460 = vmatprep.subr.bf16.mxu0 0
    %461 = vmatpush2.bf16.msra.mxu0 0
    %462 = vmatprep.subr.bf16.mxu0 0
    %463 = vmatpush2.bf16.msra.mxu0 0
    %464 = vmatprep.subr.bf16.mxu0 0
    %465 = vmatpush2.bf16.msra.mxu0 0
    %466 = vmatprep.subr.bf16.mxu0 0
    %467 = vmatpush2.bf16.msra.mxu0 0
    %468 = vmatprep.mubr.bf16.mxu0 0
    %469 = vmatmul.mubr.bf16.gmra.mxu0 %v412
    %v470 = vpop.f32.mrf.mxu0
    %v471 = vadd.f32 %v306, %v470
    %v472 = vpop.f32.mrf.mxu0
    %v473 = vpop.f32.mrf.mxu0
    %v474 = vadd.f32 %v309, %v473
    %v475 = vpop.f32.mrf.mxu0
    %476 = vmatprep.mubr.bf16.mxu0 0
    %477 = vmatmul.mubr.bf16.gmra.mxu0 %v414
    %v478 = vpop.f32.mrf.mxu0
    %v479 = vadd.f32 %v314, %v478
    %v480 = vpop.f32.mrf.mxu0
    %v481 = vpop.f32.mrf.mxu0
    %v482 = vadd.f32 %v317, %v481
    %v483 = vpop.f32.mrf.mxu0
    %484 = vmatprep.mubr.bf16.mxu0 0
    %485 = vmatmul.mubr.bf16.gmra.mxu0 %v416
    %v486 = vpop.f32.mrf.mxu0
    %v487 = vadd.f32 %v322, %v486
    %v488 = vpop.f32.mrf.mxu0
    %v489 = vpop.f32.mrf.mxu0
    %v490 = vadd.f32 %v325, %v489
    %v491 = vpop.f32.mrf.mxu0
    %492 = vmatprep.mubr.bf16.mxu0 0
    %493 = vmatmul.mubr.bf16.gmra.mxu0 %v418
    %v494 = vpop.f32.mrf.mxu0
    %v495 = vadd.f32 %v330, %v494
    %v496 = vpop.f32.mrf.mxu0
    %v497 = vpop.f32.mrf.mxu0
    %v498 = vadd.f32 %v333, %v497
    %v499 = vpop.f32.mrf.mxu0
    %500 = vmatprep.mubr.bf16.mxu0 0
    %501 = vmatmul.mubr.bf16.gmra.mxu0 %v420
    %v502 = vpop.f32.mrf.mxu0
    %v503 = vadd.f32 %v338, %v502
    %v504 = vpop.f32.mrf.mxu0
    %v505 = vpop.f32.mrf.mxu0
    %v506 = vadd.f32 %v341, %v505
    %v507 = vpop.f32.mrf.mxu0
    %508 = vmatprep.mubr.bf16.mxu0 0
    %509 = vmatmul.mubr.bf16.gmra.mxu0 %v422
    %v510 = vpop.f32.mrf.mxu0
    %v511 = vadd.f32 %v346, %v510
    %v512 = vpop.f32.mrf.mxu0
    %v513 = vpop.f32.mrf.mxu0
    %v514 = vadd.f32 %v349, %v513
    %v515 = vpop.f32.mrf.mxu0
    %516 = vmatprep.mubr.bf16.mxu0 0
    %517 = vmatmul.mubr.bf16.gmra.mxu0 %v424
    %v518 = vpop.f32.mrf.mxu0
    %v519 = vadd.f32 %v354, %v518
    %v520 = vpop.f32.mrf.mxu0
    %v521 = vpop.f32.mrf.mxu0
    %v522 = vadd.f32 %v357, %v521
    %v523 = vpop.f32.mrf.mxu0
    %524 = vmatprep.mubr.bf16.mxu0 0
    %525 = vmatmul.mubr.bf16.gmra.mxu0 %v426
    %v526 = vpop.f32.mrf.mxu0
    %v527 = vadd.f32 %v362, %v526
    %v528 = vpop.f32.mrf.mxu0
    %v529 = vpop.f32.mrf.mxu0
    %v530 = vadd.f32 %v365, %v529
    %v531 = vpop.f32.mrf.mxu0
    %532 = vmatprep.mubr.bf16.mxu0 0
    %533 = vmatmul.mubr.bf16.gmra.mxu0 %v428
    %v534 = vpop.f32.mrf.mxu0
    %v535 = vadd.f32 %v370, %v534
    %v536 = vpop.f32.mrf.mxu0
    %v537 = vpop.f32.mrf.mxu0
    %v538 = vadd.f32 %v373, %v537
    %v539 = vpop.f32.mrf.mxu0
    %540 = vmatprep.mubr.bf16.mxu0 0
    %541 = vmatmul.mubr.bf16.gmra.mxu0 %v430
    %v542 = vpop.f32.mrf.mxu0
    %v543 = vadd.f32 %v378, %v542
    %v544 = vpop.f32.mrf.mxu0
    %v545 = vpop.f32.mrf.mxu0
    %v546 = vadd.f32 %v381, %v545
    %v547 = vpop.f32.mrf.mxu0
    %548 = vmatprep.mubr.bf16.mxu0 0
    %549 = vmatmul.mubr.bf16.gmra.mxu0 %v432
    %v550 = vpop.f32.mrf.mxu0
    %v551 = vadd.f32 %v386, %v550
    %v552 = vpop.f32.mrf.mxu0
    %v553 = vpop.f32.mrf.mxu0
    %v554 = vadd.f32 %v389, %v553
    %v555 = vpop.f32.mrf.mxu0
    %556 = vmatprep.mubr.bf16.mxu0 0
    %557 = vmatmul.mubr.bf16.gmra.mxu0 %v434
    %v558 = vpop.f32.mrf.mxu0
    %v559 = vadd.f32 %v394, %v558
    %v560 = vpop.f32.mrf.mxu0
    %v561 = vpop.f32.mrf.mxu0
    %v562 = vadd.f32 %v397, %v561
    %v563 = vpop.f32.mrf.mxu0
    %564 = vdwg.mxu0
    %s565 = scalar_lea.vmem %s1, 32
    %v566 = vld [vmem:[%s565] sm:$0xf]
    %v567 = vld [vmem:[%s565 + $0x4] sm:$0xf]
    %v568 = vld [vmem:[%s565 + $0x8] sm:$0xf]
    %v569 = vld [vmem:[%s565 + $0xc] sm:$0xf]
    %vm570 = vcmask 1046528
    %v571 = vrot.slane %v114, 1
    %v572 = vrot.slane %v115, 1
    %v573 = vsel %vm570, %v571, %v572
    %v574 = vrot.slane %v116, 1
    %v575 = vsel %vm570, %v572, %v574
    %v576 = vrot.slane %v117, 1
    %v577 = vsel %vm570, %v574, %v576
    %v578 = vrot.slane %v118, 1
    %v579 = vsel %vm570, %v576, %v578
    %v580 = vrot.slane %v119, 1
    %v581 = vsel %vm570, %v578, %v580
    %v582 = vrot.slane %v120, 1
    %v583 = vsel %vm570, %v580, %v582
    %v584 = vrot.slane %v121, 1
    %v585 = vsel %vm570, %v582, %v584
    %v586 = vrot.slane %v122, 1
    %v587 = vsel %vm570, %v584, %v586
    %v588 = vrot.slane %v123, 1
    %v589 = vsel %vm570, %v586, %v588
    %v590 = vrot.slane %v124, 1
    %v591 = vsel %vm570, %v588, %v590
    %v592 = vrot.slane %v125, 1
    %v593 = vsel %vm570, %v590, %v592
    %v598 = vunpack.c.l.b16 %v566
    %v599 = vunpack.c.l.b16 %v567
    %v600 = vunpack.c.l.b16 %v568
    %v601 = vunpack.c.l.b16 %v569
    %v602 = vpack.c.b16 %v599, %v598
    %v603 = vpack.c.b16 %v601, %v600
    %v607 = vsel %vm234, %v573, 0
    %v610 = vsel %vm234, %v575, 0
    %v613 = vsel %vm234, %v577, 0
    %v616 = vsel %vm234, %v579, 0
    %v619 = vsel %vm234, %v581, 0
    %v622 = vsel %vm234, %v583, 0
    %v625 = vsel %vm234, %v585, 0
    %v628 = vsel %vm234, %v587, 0
    %v631 = vsel %vm234, %v589, 0
    %v634 = vsel %vm234, %v591, 0
    %v637 = vsel %vm234, %v593, 0
    %v640 = vsel %vm234, %v592, 0
    %642 = vmatprep.subr.bf16.mxu0 0
    %643 = vmatpush1.bf16.msra.mxu0 0
    %644 = vmatprep.subr.bf16.mxu0 0
    %645 = vmatpush1.bf16.msra.mxu0 0
    %646 = vmatprep.subr.bf16.mxu0 0
    %647 = vmatpush1.bf16.msra.mxu0 0
    %648 = vmatprep.subr.bf16.mxu0 0
    %649 = vmatpush1.bf16.msra.mxu0 0
    %650 = vmatprep.subr.bf16.mxu0 0
    %651 = vmatpush1.bf16.msra.mxu0 0
    %652 = vmatprep.subr.bf16.mxu0 0
    %653 = vmatpush1.bf16.msra.mxu0 0
    %654 = vmatprep.subr.bf16.mxu0 0
    %655 = vmatpush1.bf16.msra.mxu0 %v603
    %656 = vmatprep.subr.bf16.mxu0 0
    %657 = vmatpush1.bf16.msra.mxu0 %v602
    %658 = vmatprep.subr.bf16.mxu0 0
    %659 = vmatpush2.bf16.msra.mxu0 0
    %660 = vmatprep.subr.bf16.mxu0 0
    %661 = vmatpush2.bf16.msra.mxu0 0
    %662 = vmatprep.subr.bf16.mxu0 0
    %663 = vmatpush2.bf16.msra.mxu0 0
    %664 = vmatprep.subr.bf16.mxu0 0
    %665 = vmatpush2.bf16.msra.mxu0 0
    %666 = vmatprep.subr.bf16.mxu0 0
    %667 = vmatpush2.bf16.msra.mxu0 0
    %668 = vmatprep.subr.bf16.mxu0 0
    %669 = vmatpush2.bf16.msra.mxu0 0
    %670 = vmatprep.subr.bf16.mxu0 0
    %671 = vmatpush2.bf16.msra.mxu0 0
    %672 = vmatprep.subr.bf16.mxu0 0
    %673 = vmatpush2.bf16.msra.mxu0 0
    %674 = vmatprep.mubr.bf16.mxu0 0
    %675 = vmatmul.mubr.bf16.gmra.mxu0 %v607
    %v676 = vpop.f32.mrf.mxu0
    %v677 = vadd.f32 0.0, %v676
    %v678 = vpop.f32.mrf.mxu0
    %v679 = vpop.f32.mrf.mxu0
    %v680 = vadd.f32 0.0, %v679
    %v681 = vpop.f32.mrf.mxu0
    %682 = vmatprep.mubr.bf16.mxu0 0
    %683 = vmatmul.mubr.bf16.gmra.mxu0 %v610
    %v684 = vpop.f32.mrf.mxu0
    %v685 = vadd.f32 0.0, %v684
    %v686 = vpop.f32.mrf.mxu0
    %v687 = vpop.f32.mrf.mxu0
    %v688 = vadd.f32 0.0, %v687
    %v689 = vpop.f32.mrf.mxu0
    %690 = vmatprep.mubr.bf16.mxu0 0
    %691 = vmatmul.mubr.bf16.gmra.mxu0 %v613
    %v692 = vpop.f32.mrf.mxu0
    %v693 = vadd.f32 0.0, %v692
    %v694 = vpop.f32.mrf.mxu0
    %v695 = vpop.f32.mrf.mxu0
    %v696 = vadd.f32 0.0, %v695
    %v697 = vpop.f32.mrf.mxu0
    %698 = vmatprep.mubr.bf16.mxu0 0
    %699 = vmatmul.mubr.bf16.gmra.mxu0 %v616
    %v700 = vpop.f32.mrf.mxu0
    %v701 = vadd.f32 0.0, %v700
    %v702 = vpop.f32.mrf.mxu0
    %v703 = vpop.f32.mrf.mxu0
    %v704 = vadd.f32 0.0, %v703
    %v705 = vpop.f32.mrf.mxu0
    %706 = vmatprep.mubr.bf16.mxu0 0
    %707 = vmatmul.mubr.bf16.gmra.mxu0 %v619
    %v708 = vpop.f32.mrf.mxu0
    %v709 = vadd.f32 0.0, %v708
    %v710 = vpop.f32.mrf.mxu0
    %v711 = vpop.f32.mrf.mxu0
    %v712 = vadd.f32 0.0, %v711
    %v713 = vpop.f32.mrf.mxu0
    %714 = vmatprep.mubr.bf16.mxu0 0
    %715 = vmatmul.mubr.bf16.gmra.mxu0 %v622
    %v716 = vpop.f32.mrf.mxu0
    %v717 = vadd.f32 0.0, %v716
    %v718 = vpop.f32.mrf.mxu0
    %v719 = vpop.f32.mrf.mxu0
    %v720 = vadd.f32 0.0, %v719
    %v721 = vpop.f32.mrf.mxu0
    %722 = vmatprep.mubr.bf16.mxu0 0
    %723 = vmatmul.mubr.bf16.gmra.mxu0 %v625
    %v724 = vpop.f32.mrf.mxu0
    %v725 = vadd.f32 0.0, %v724
    %v726 = vpop.f32.mrf.mxu0
    %v727 = vpop.f32.mrf.mxu0
    %v728 = vadd.f32 0.0, %v727
    %v729 = vpop.f32.mrf.mxu0
    %730 = vmatprep.mubr.bf16.mxu0 0
    %731 = vmatmul.mubr.bf16.gmra.mxu0 %v628
    %v732 = vpop.f32.mrf.mxu0
    %v733 = vadd.f32 0.0, %v732
    %v734 = vpop.f32.mrf.mxu0
    %v735 = vpop.f32.mrf.mxu0
    %v736 = vadd.f32 0.0, %v735
    %v737 = vpop.f32.mrf.mxu0
    %738 = vmatprep.mubr.bf16.mxu0 0
    %739 = vmatmul.mubr.bf16.gmra.mxu0 %v631
    %v740 = vpop.f32.mrf.mxu0
    %v741 = vadd.f32 0.0, %v740
    %v742 = vpop.f32.mrf.mxu0
    %v743 = vpop.f32.mrf.mxu0
    %v744 = vadd.f32 0.0, %v743
    %v745 = vpop.f32.mrf.mxu0
    %746 = vmatprep.mubr.bf16.mxu0 0
    %747 = vmatmul.mubr.bf16.gmra.mxu0 %v634
    %v748 = vpop.f32.mrf.mxu0
    %v749 = vadd.f32 0.0, %v748
    %v750 = vpop.f32.mrf.mxu0
    %v751 = vpop.f32.mrf.mxu0
    %v752 = vadd.f32 0.0, %v751
    %v753 = vpop.f32.mrf.mxu0
    %754 = vmatprep.mubr.bf16.mxu0 0
    %755 = vmatmul.mubr.bf16.gmra.mxu0 %v637
    %v756 = vpop.f32.mrf.mxu0
    %v757 = vadd.f32 0.0, %v756
    %v758 = vpop.f32.mrf.mxu0
    %v759 = vpop.f32.mrf.mxu0
    %v760 = vadd.f32 0.0, %v759
    %v761 = vpop.f32.mrf.mxu0
    %762 = vmatprep.mubr.bf16.mxu0 0
    %763 = vmatmul.mubr.bf16.gmra.mxu0 %v640
    %v764 = vpop.f32.mrf.mxu0
    %v765 = vadd.f32 0.0, %v764
    %v766 = vpop.f32.mrf.mxu0
    %v767 = vpop.f32.mrf.mxu0
    %v768 = vadd.f32 0.0, %v767
    %v769 = vpop.f32.mrf.mxu0
    %770 = vdwg.mxu0
    %v771 = vadd.f32 %v471, %v677
    %v772 = vadd.f32 %v474, %v680
    %v773 = vadd.f32 %v479, %v685
    %v774 = vadd.f32 %v482, %v688
    %v775 = vadd.f32 %v487, %v693
    %v776 = vadd.f32 %v490, %v696
    %v777 = vadd.f32 %v495, %v701
    %v778 = vadd.f32 %v498, %v704
    %v779 = vadd.f32 %v503, %v709
    %v780 = vadd.f32 %v506, %v712
    %v781 = vadd.f32 %v511, %v717
    %v782 = vadd.f32 %v514, %v720
    %v783 = vadd.f32 %v519, %v725
    %v784 = vadd.f32 %v522, %v728
    %v785 = vadd.f32 %v527, %v733
    %v786 = vadd.f32 %v530, %v736
    %v787 = vadd.f32 %v535, %v741
    %v788 = vadd.f32 %v538, %v744
    %v789 = vadd.f32 %v543, %v749
    %v790 = vadd.f32 %v546, %v752
    %v791 = vadd.f32 %v551, %v757
    %v792 = vadd.f32 %v554, %v760
    %v793 = vadd.f32 %v559, %v765
    %v794 = vadd.f32 %v562, %v768
    %s795 = scalar_lea.vmem %s1, 48
    %v796 = vld [vmem:[%s795] sm:$0xf]
    %v797 = vld [vmem:[%s795 + $0x4] sm:$0xf]
    %v798 = vld [vmem:[%s795 + $0x8] sm:$0xf]
    %v799 = vld [vmem:[%s795 + $0xc] sm:$0xf]
    %vm800 = vsmask.f32 6400
    %v801 = vrot.slane %v128, 1
    %v802 = vrot.slane %v130, 2
    %v803 = vor.u32 %v801, %v802
    %v804 = vrot.slane %v139, 1
    %v805 = vrot.slane %v135, 2
    %v806 = vor.u32 %v804, %v805
    %v807 = vsel %vm800, %v803, %v806
    %v808 = vrot.slane %v147, 1
    %v809 = vrot.slane %v143, 2
    %v810 = vor.u32 %v808, %v809
    %v811 = vsel %vm800, %v806, %v810
    %v812 = vrot.slane %v155, 1
    %v813 = vrot.slane %v151, 2
    %v814 = vor.u32 %v812, %v813
    %v815 = vsel %vm800, %v810, %v814
    %v816 = vrot.slane %v163, 1
    %v817 = vrot.slane %v159, 2
    %v818 = vor.u32 %v816, %v817
    %v819 = vsel %vm800, %v814, %v818
    %v820 = vrot.slane %v171, 1
    %v821 = vrot.slane %v167, 2
    %v822 = vor.u32 %v820, %v821
    %v823 = vsel %vm800, %v818, %v822
    %v824 = vrot.slane %v179, 1
    %v825 = vrot.slane %v175, 2
    %v826 = vor.u32 %v824, %v825
    %v827 = vsel %vm800, %v822, %v826
    %v828 = vrot.slane %v187, 1
    %v829 = vrot.slane %v183, 2
    %v830 = vor.u32 %v828, %v829
    %v831 = vsel %vm800, %v826, %v830
    %v832 = vrot.slane %v195, 1
    %v833 = vrot.slane %v191, 2
    %v834 = vor.u32 %v832, %v833
    %v835 = vsel %vm800, %v830, %v834
    %v836 = vrot.slane %v203, 1
    %v837 = vrot.slane %v199, 2
    %v838 = vor.u32 %v836, %v837
    %v839 = vsel %vm800, %v834, %v838
    %v840 = vrot.slane %v211, 1
    %v841 = vrot.slane %v207, 2
    %v842 = vor.u32 %v840, %v841
    %v843 = vsel %vm800, %v838, %v842
    %v844 = vrot.slane %v219, 1
    %v845 = vrot.slane %v215, 2
    %v846 = vor.u32 %v844, %v845
    %v847 = vsel %vm800, %v842, %v846
    %v852 = vunpack.c.l.b16 %v796
    %v853 = vunpack.c.l.b16 %v797
    %v854 = vunpack.c.l.b16 %v798
    %v855 = vunpack.c.l.b16 %v799
    %v856 = vpack.c.b16 %v853, %v852
    %v857 = vpack.c.b16 %v855, %v854
    %v861 = vsel %vm234, %v807, 0
    %v864 = vsel %vm234, %v811, 0
    %v867 = vsel %vm234, %v815, 0
    %v870 = vsel %vm234, %v819, 0
    %v873 = vsel %vm234, %v823, 0
    %v876 = vsel %vm234, %v827, 0
    %v879 = vsel %vm234, %v831, 0
    %v882 = vsel %vm234, %v835, 0
    %v885 = vsel %vm234, %v839, 0
    %v888 = vsel %vm234, %v843, 0
    %v891 = vsel %vm234, %v847, 0
    %v894 = vsel %vm234, %v846, 0
    %896 = vmatprep.subr.bf16.mxu0 0
    %897 = vmatpush1.bf16.msra.mxu0 0
    %898 = vmatprep.subr.bf16.mxu0 0
    %899 = vmatpush1.bf16.msra.mxu0 0
    %900 = vmatprep.subr.bf16.mxu0 0
    %901 = vmatpush1.bf16.msra.mxu0 0
    %902 = vmatprep.subr.bf16.mxu0 0
    %903 = vmatpush1.bf16.msra.mxu0 0
    %904 = vmatprep.subr.bf16.mxu0 0
    %905 = vmatpush1.bf16.msra.mxu0 0
    %906 = vmatprep.subr.bf16.mxu0 0
    %907 = vmatpush1.bf16.msra.mxu0 0
    %908 = vmatprep.subr.bf16.mxu0 0
    %909 = vmatpush1.bf16.msra.mxu0 %v857
    %910 = vmatprep.subr.bf16.mxu0 0
    %911 = vmatpush1.bf16.msra.mxu0 %v856
    %912 = vmatprep.subr.bf16.mxu0 0
    %913 = vmatpush2.bf16.msra.mxu0 0
    %914 = vmatprep.subr.bf16.mxu0 0
    %915 = vmatpush2.bf16.msra.mxu0 0
    %916 = vmatprep.subr.bf16.mxu0 0
    %917 = vmatpush2.bf16.msra.mxu0 0
    %918 = vmatprep.subr.bf16.mxu0 0
    %919 = vmatpush2.bf16.msra.mxu0 0
    %920 = vmatprep.subr.bf16.mxu0 0
    %921 = vmatpush2.bf16.msra.mxu0 0
    %922 = vmatprep.subr.bf16.mxu0 0
    %923 = vmatpush2.bf16.msra.mxu0 0
    %924 = vmatprep.subr.bf16.mxu0 0
    %925 = vmatpush2.bf16.msra.mxu0 0
    %926 = vmatprep.subr.bf16.mxu0 0
    %927 = vmatpush2.bf16.msra.mxu0 0
    %928 = vmatprep.mubr.bf16.mxu0 0
    %929 = vmatmul.mubr.bf16.gmra.mxu0 %v861
    %v930 = vpop.f32.mrf.mxu0
    %v931 = vadd.f32 0.0, %v930
    %v932 = vpop.f32.mrf.mxu0
    %v933 = vpop.f32.mrf.mxu0
    %v934 = vadd.f32 0.0, %v933
    %v935 = vpop.f32.mrf.mxu0
    %936 = vmatprep.mubr.bf16.mxu0 0
    %937 = vmatmul.mubr.bf16.gmra.mxu0 %v864
    %v938 = vpop.f32.mrf.mxu0
    %v939 = vadd.f32 0.0, %v938
    %v940 = vpop.f32.mrf.mxu0
    %v941 = vpop.f32.mrf.mxu0
    %v942 = vadd.f32 0.0, %v941
    %v943 = vpop.f32.mrf.mxu0
    %944 = vmatprep.mubr.bf16.mxu0 0
    %945 = vmatmul.mubr.bf16.gmra.mxu0 %v867
    %v946 = vpop.f32.mrf.mxu0
    %v947 = vadd.f32 0.0, %v946
    %v948 = vpop.f32.mrf.mxu0
    %v949 = vpop.f32.mrf.mxu0
    %v950 = vadd.f32 0.0, %v949
    %v951 = vpop.f32.mrf.mxu0
    %952 = vmatprep.mubr.bf16.mxu0 0
    %953 = vmatmul.mubr.bf16.gmra.mxu0 %v870
    %v954 = vpop.f32.mrf.mxu0
    %v955 = vadd.f32 0.0, %v954
    %v956 = vpop.f32.mrf.mxu0
    %v957 = vpop.f32.mrf.mxu0
    %v958 = vadd.f32 0.0, %v957
    %v959 = vpop.f32.mrf.mxu0
    %960 = vmatprep.mubr.bf16.mxu0 0
    %961 = vmatmul.mubr.bf16.gmra.mxu0 %v873
    %v962 = vpop.f32.mrf.mxu0
    %v963 = vadd.f32 0.0, %v962
    %v964 = vpop.f32.mrf.mxu0
    %v965 = vpop.f32.mrf.mxu0
    %v966 = vadd.f32 0.0, %v965
    %v967 = vpop.f32.mrf.mxu0
    %968 = vmatprep.mubr.bf16.mxu0 0
    %969 = vmatmul.mubr.bf16.gmra.mxu0 %v876
    %v970 = vpop.f32.mrf.mxu0
    %v971 = vadd.f32 0.0, %v970
    %v972 = vpop.f32.mrf.mxu0
    %v973 = vpop.f32.mrf.mxu0
    %v974 = vadd.f32 0.0, %v973
    %v975 = vpop.f32.mrf.mxu0
    %976 = vmatprep.mubr.bf16.mxu0 0
    %977 = vmatmul.mubr.bf16.gmra.mxu0 %v879
    %v978 = vpop.f32.mrf.mxu0
    %v979 = vadd.f32 0.0, %v978
    %v980 = vpop.f32.mrf.mxu0
    %v981 = vpop.f32.mrf.mxu0
    %v982 = vadd.f32 0.0, %v981
    %v983 = vpop.f32.mrf.mxu0
    %984 = vmatprep.mubr.bf16.mxu0 0
    %985 = vmatmul.mubr.bf16.gmra.mxu0 %v882
    %v986 = vpop.f32.mrf.mxu0
    %v987 = vadd.f32 0.0, %v986
    %v988 = vpop.f32.mrf.mxu0
    %v989 = vpop.f32.mrf.mxu0
    %v990 = vadd.f32 0.0, %v989
    %v991 = vpop.f32.mrf.mxu0
    %992 = vmatprep.mubr.bf16.mxu0 0
    %993 = vmatmul.mubr.bf16.gmra.mxu0 %v885
    %v994 = vpop.f32.mrf.mxu0
    %v995 = vadd.f32 0.0, %v994
    %v996 = vpop.f32.mrf.mxu0
    %v997 = vpop.f32.mrf.mxu0
    %v998 = vadd.f32 0.0, %v997
    %v999 = vpop.f32.mrf.mxu0
    %1000 = vmatprep.mubr.bf16.mxu0 0
    %1001 = vmatmul.mubr.bf16.gmra.mxu0 %v888
    %v1002 = vpop.f32.mrf.mxu0
    %v1003 = vadd.f32 0.0, %v1002
    %v1004 = vpop.f32.mrf.mxu0
    %v1005 = vpop.f32.mrf.mxu0
    %v1006 = vadd.f32 0.0, %v1005
    %v1007 = vpop.f32.mrf.mxu0
    %1008 = vmatprep.mubr.bf16.mxu0 0
    %1009 = vmatmul.mubr.bf16.gmra.mxu0 %v891
    %v1010 = vpop.f32.mrf.mxu0
    %v1011 = vadd.f32 0.0, %v1010
    %v1012 = vpop.f32.mrf.mxu0
    %v1013 = vpop.f32.mrf.mxu0
    %v1014 = vadd.f32 0.0, %v1013
    %v1015 = vpop.f32.mrf.mxu0
    %1016 = vmatprep.mubr.bf16.mxu0 0
    %1017 = vmatmul.mubr.bf16.gmra.mxu0 %v894
    %v1018 = vpop.f32.mrf.mxu0
    %v1019 = vadd.f32 0.0, %v1018
    %v1020 = vpop.f32.mrf.mxu0
    %v1021 = vpop.f32.mrf.mxu0
    %v1022 = vadd.f32 0.0, %v1021
    %v1023 = vpop.f32.mrf.mxu0
    %1024 = vdwg.mxu0
    %v1025 = vadd.f32 %v771, %v931
    %v1026 = vadd.f32 %v772, %v934
    %v1027 = vadd.f32 %v773, %v939
    %v1028 = vadd.f32 %v774, %v942
    %v1029 = vadd.f32 %v775, %v947
    %v1030 = vadd.f32 %v776, %v950
    %v1031 = vadd.f32 %v777, %v955
    %v1032 = vadd.f32 %v778, %v958
    %v1033 = vadd.f32 %v779, %v963
    %v1034 = vadd.f32 %v780, %v966
    %v1035 = vadd.f32 %v781, %v971
    %v1036 = vadd.f32 %v782, %v974
    %v1037 = vadd.f32 %v783, %v979
    %v1038 = vadd.f32 %v784, %v982
    %v1039 = vadd.f32 %v785, %v987
    %v1040 = vadd.f32 %v786, %v990
    %v1041 = vadd.f32 %v787, %v995
    %v1042 = vadd.f32 %v788, %v998
    %v1043 = vadd.f32 %v789, %v1003
    %v1044 = vadd.f32 %v790, %v1006
    %v1045 = vadd.f32 %v791, %v1011
    %v1046 = vadd.f32 %v792, %v1014
    %v1047 = vadd.f32 %v793, %v1019
    %v1048 = vadd.f32 %v794, %v1022
    %s1049 = scalar_lea.vmem %s1, 64
    %v1050 = vld [vmem:[%s1049] sm:$0xf]
    %v1051 = vld [vmem:[%s1049 + $0x4] sm:$0xf]
    %v1052 = vld [vmem:[%s1049 + $0x8] sm:$0xf]
    %v1053 = vld [vmem:[%s1049 + $0xc] sm:$0xf]
    %vm1054 = vcmask 1045504
    %v1055 = vrot.slane %v114, 2
    %v1056 = vrot.slane %v115, 2
    %v1057 = vsel %vm1054, %v1055, %v1056
    %v1058 = vrot.slane %v116, 2
    %v1059 = vsel %vm1054, %v1056, %v1058
    %v1060 = vrot.slane %v117, 2
    %v1061 = vsel %vm1054, %v1058, %v1060
    %v1062 = vrot.slane %v118, 2
    %v1063 = vsel %vm1054, %v1060, %v1062
    %v1064 = vrot.slane %v119, 2
    %v1065 = vsel %vm1054, %v1062, %v1064
    %v1066 = vrot.slane %v120, 2
    %v1067 = vsel %vm1054, %v1064, %v1066
    %v1068 = vrot.slane %v121, 2
    %v1069 = vsel %vm1054, %v1066, %v1068
    %v1070 = vrot.slane %v122, 2
    %v1071 = vsel %vm1054, %v1068, %v1070
    %v1072 = vrot.slane %v123, 2
    %v1073 = vsel %vm1054, %v1070, %v1072
    %v1074 = vrot.slane %v124, 2
    %v1075 = vsel %vm1054, %v1072, %v1074
    %v1076 = vrot.slane %v125, 2
    %v1077 = vsel %vm1054, %v1074, %v1076
    %v1082 = vunpack.c.l.b16 %v1050
    %v1083 = vunpack.c.l.b16 %v1051
    %v1084 = vunpack.c.l.b16 %v1052
    %v1085 = vunpack.c.l.b16 %v1053
    %v1086 = vpack.c.b16 %v1083, %v1082
    %v1087 = vpack.c.b16 %v1085, %v1084
    %v1091 = vsel %vm234, %v1057, 0
    %v1094 = vsel %vm234, %v1059, 0
    %v1097 = vsel %vm234, %v1061, 0
    %v1100 = vsel %vm234, %v1063, 0
    %v1103 = vsel %vm234, %v1065, 0
    %v1106 = vsel %vm234, %v1067, 0
    %v1109 = vsel %vm234, %v1069, 0
    %v1112 = vsel %vm234, %v1071, 0
    %v1115 = vsel %vm234, %v1073, 0
    %v1118 = vsel %vm234, %v1075, 0
    %v1121 = vsel %vm234, %v1077, 0
    %v1124 = vsel %vm234, %v1076, 0
    %1126 = vmatprep.subr.bf16.mxu0 0
    %1127 = vmatpush1.bf16.msra.mxu0 0
    %1128 = vmatprep.subr.bf16.mxu0 0
    %1129 = vmatpush1.bf16.msra.mxu0 0
    %1130 = vmatprep.subr.bf16.mxu0 0
    %1131 = vmatpush1.bf16.msra.mxu0 0
    %1132 = vmatprep.subr.bf16.mxu0 0
    %1133 = vmatpush1.bf16.msra.mxu0 0
    %1134 = vmatprep.subr.bf16.mxu0 0
    %1135 = vmatpush1.bf16.msra.mxu0 0
    %1136 = vmatprep.subr.bf16.mxu0 0
    %1137 = vmatpush1.bf16.msra.mxu0 0
    %1138 = vmatprep.subr.bf16.mxu0 0
    %1139 = vmatpush1.bf16.msra.mxu0 %v1087
    %1140 = vmatprep.subr.bf16.mxu0 0
    %1141 = vmatpush1.bf16.msra.mxu0 %v1086
    %1142 = vmatprep.subr.bf16.mxu0 0
    %1143 = vmatpush2.bf16.msra.mxu0 0
    %1144 = vmatprep.subr.bf16.mxu0 0
    %1145 = vmatpush2.bf16.msra.mxu0 0
    %1146 = vmatprep.subr.bf16.mxu0 0
    %1147 = vmatpush2.bf16.msra.mxu0 0
    %1148 = vmatprep.subr.bf16.mxu0 0
    %1149 = vmatpush2.bf16.msra.mxu0 0
    %1150 = vmatprep.subr.bf16.mxu0 0
    %1151 = vmatpush2.bf16.msra.mxu0 0
    %1152 = vmatprep.subr.bf16.mxu0 0
    %1153 = vmatpush2.bf16.msra.mxu0 0
    %1154 = vmatprep.subr.bf16.mxu0 0
    %1155 = vmatpush2.bf16.msra.mxu0 0
    %1156 = vmatprep.subr.bf16.mxu0 0
    %1157 = vmatpush2.bf16.msra.mxu0 0
    %1158 = vmatprep.mubr.bf16.mxu0 0
    %1159 = vmatmul.mubr.bf16.gmra.mxu0 %v1091
    %v1160 = vpop.f32.mrf.mxu0
    %v1161 = vadd.f32 0.0, %v1160
    %v1162 = vpop.f32.mrf.mxu0
    %v1163 = vpop.f32.mrf.mxu0
    %v1164 = vadd.f32 0.0, %v1163
    %v1165 = vpop.f32.mrf.mxu0
    %1166 = vmatprep.mubr.bf16.mxu0 0
    %1167 = vmatmul.mubr.bf16.gmra.mxu0 %v1094
    %v1168 = vpop.f32.mrf.mxu0
    %v1169 = vadd.f32 0.0, %v1168
    %v1170 = vpop.f32.mrf.mxu0
    %v1171 = vpop.f32.mrf.mxu0
    %v1172 = vadd.f32 0.0, %v1171
    %v1173 = vpop.f32.mrf.mxu0
    %1174 = vmatprep.mubr.bf16.mxu0 0
    %1175 = vmatmul.mubr.bf16.gmra.mxu0 %v1097
    %v1176 = vpop.f32.mrf.mxu0
    %v1177 = vadd.f32 0.0, %v1176
    %v1178 = vpop.f32.mrf.mxu0
    %v1179 = vpop.f32.mrf.mxu0
    %v1180 = vadd.f32 0.0, %v1179
    %v1181 = vpop.f32.mrf.mxu0
    %1182 = vmatprep.mubr.bf16.mxu0 0
    %1183 = vmatmul.mubr.bf16.gmra.mxu0 %v1100
    %v1184 = vpop.f32.mrf.mxu0
    %v1185 = vadd.f32 0.0, %v1184
    %v1186 = vpop.f32.mrf.mxu0
    %v1187 = vpop.f32.mrf.mxu0
    %v1188 = vadd.f32 0.0, %v1187
    %v1189 = vpop.f32.mrf.mxu0
    %1190 = vmatprep.mubr.bf16.mxu0 0
    %1191 = vmatmul.mubr.bf16.gmra.mxu0 %v1103
    %v1192 = vpop.f32.mrf.mxu0
    %v1193 = vadd.f32 0.0, %v1192
    %v1194 = vpop.f32.mrf.mxu0
    %v1195 = vpop.f32.mrf.mxu0
    %v1196 = vadd.f32 0.0, %v1195
    %v1197 = vpop.f32.mrf.mxu0
    %1198 = vmatprep.mubr.bf16.mxu0 0
    %1199 = vmatmul.mubr.bf16.gmra.mxu0 %v1106
    %v1200 = vpop.f32.mrf.mxu0
    %v1201 = vadd.f32 0.0, %v1200
    %v1202 = vpop.f32.mrf.mxu0
    %v1203 = vpop.f32.mrf.mxu0
    %v1204 = vadd.f32 0.0, %v1203
    %v1205 = vpop.f32.mrf.mxu0
    %1206 = vmatprep.mubr.bf16.mxu0 0
    %1207 = vmatmul.mubr.bf16.gmra.mxu0 %v1109
    %v1208 = vpop.f32.mrf.mxu0
    %v1209 = vadd.f32 0.0, %v1208
    %v1210 = vpop.f32.mrf.mxu0
    %v1211 = vpop.f32.mrf.mxu0
    %v1212 = vadd.f32 0.0, %v1211
    %v1213 = vpop.f32.mrf.mxu0
    %1214 = vmatprep.mubr.bf16.mxu0 0
    %1215 = vmatmul.mubr.bf16.gmra.mxu0 %v1112
    %v1216 = vpop.f32.mrf.mxu0
    %v1217 = vadd.f32 0.0, %v1216
    %v1218 = vpop.f32.mrf.mxu0
    %v1219 = vpop.f32.mrf.mxu0
    %v1220 = vadd.f32 0.0, %v1219
    %v1221 = vpop.f32.mrf.mxu0
    %1222 = vmatprep.mubr.bf16.mxu0 0
    %1223 = vmatmul.mubr.bf16.gmra.mxu0 %v1115
    %v1224 = vpop.f32.mrf.mxu0
    %v1225 = vadd.f32 0.0, %v1224
    %v1226 = vpop.f32.mrf.mxu0
    %v1227 = vpop.f32.mrf.mxu0
    %v1228 = vadd.f32 0.0, %v1227
    %v1229 = vpop.f32.mrf.mxu0
    %1230 = vmatprep.mubr.bf16.mxu0 0
    %1231 = vmatmul.mubr.bf16.gmra.mxu0 %v1118
    %v1232 = vpop.f32.mrf.mxu0
    %v1233 = vadd.f32 0.0, %v1232
    %v1234 = vpop.f32.mrf.mxu0
    %v1235 = vpop.f32.mrf.mxu0
    %v1236 = vadd.f32 0.0, %v1235
    %v1237 = vpop.f32.mrf.mxu0
    %1238 = vmatprep.mubr.bf16.mxu0 0
    %1239 = vmatmul.mubr.bf16.gmra.mxu0 %v1121
    %v1240 = vpop.f32.mrf.mxu0
    %v1241 = vadd.f32 0.0, %v1240
    %v1242 = vpop.f32.mrf.mxu0
    %v1243 = vpop.f32.mrf.mxu0
    %v1244 = vadd.f32 0.0, %v1243
    %v1245 = vpop.f32.mrf.mxu0
    %1246 = vmatprep.mubr.bf16.mxu0 0
    %1247 = vmatmul.mubr.bf16.gmra.mxu0 %v1124
    %v1248 = vpop.f32.mrf.mxu0
    %v1249 = vadd.f32 0.0, %v1248
    %v1250 = vpop.f32.mrf.mxu0
    %v1251 = vpop.f32.mrf.mxu0
    %v1252 = vadd.f32 0.0, %v1251
    %v1253 = vpop.f32.mrf.mxu0
    %1254 = vdwg.mxu0
    %v1255 = vadd.f32 %v1025, %v1161
    %v1256 = vadd.f32 %v1026, %v1164
    %v1257 = vadd.f32 %v1027, %v1169
    %v1258 = vadd.f32 %v1028, %v1172
    %v1259 = vadd.f32 %v1029, %v1177
    %v1260 = vadd.f32 %v1030, %v1180
    %v1261 = vadd.f32 %v1031, %v1185
    %v1262 = vadd.f32 %v1032, %v1188
    %v1263 = vadd.f32 %v1033, %v1193
    %v1264 = vadd.f32 %v1034, %v1196
    %v1265 = vadd.f32 %v1035, %v1201
    %v1266 = vadd.f32 %v1036, %v1204
    %v1267 = vadd.f32 %v1037, %v1209
    %v1268 = vadd.f32 %v1038, %v1212
    %v1269 = vadd.f32 %v1039, %v1217
    %v1270 = vadd.f32 %v1040, %v1220
    %v1271 = vadd.f32 %v1041, %v1225
    %v1272 = vadd.f32 %v1042, %v1228
    %v1273 = vadd.f32 %v1043, %v1233
    %v1274 = vadd.f32 %v1044, %v1236
    %v1275 = vadd.f32 %v1045, %v1241
    %v1276 = vadd.f32 %v1046, %v1244
    %v1277 = vadd.f32 %v1047, %v1249
    %v1278 = vadd.f32 %v1048, %v1252
    %v1279 = vld [vmem:[%s2] sm:$0x1]
    %v1281 = vlaneseq
    %v1282 = vshrl.u32 %v1281, 7
    %v1283 = vsub.s32 0, %v1282
    %v1284 = vrot.slane %v1279, %v1283
    %v1286 = vadd.f32 %v1255, %v1284
    %v1287 = vadd.f32 %v1256, %v1284
    %v1288 = vadd.f32 %v1257, %v1284
    %v1289 = vadd.f32 %v1258, %v1284
    %v1290 = vadd.f32 %v1259, %v1284
    %v1291 = vadd.f32 %v1260, %v1284
    %v1292 = vadd.f32 %v1261, %v1284
    %v1293 = vadd.f32 %v1262, %v1284
    %v1294 = vadd.f32 %v1263, %v1284
    %v1295 = vadd.f32 %v1264, %v1284
    %v1296 = vadd.f32 %v1265, %v1284
    %v1297 = vadd.f32 %v1266, %v1284
    %v1298 = vadd.f32 %v1267, %v1284
    %v1299 = vadd.f32 %v1268, %v1284
    %v1300 = vadd.f32 %v1269, %v1284
    %v1301 = vadd.f32 %v1270, %v1284
    %v1302 = vadd.f32 %v1271, %v1284
    %v1303 = vadd.f32 %v1272, %v1284
    %v1304 = vadd.f32 %v1273, %v1284
    %v1305 = vadd.f32 %v1274, %v1284
    %v1306 = vadd.f32 %v1275, %v1284
    %v1307 = vadd.f32 %v1276, %v1284
    %v1308 = vadd.f32 %v1277, %v1284
    %v1309 = vadd.f32 %v1278, %v1284
    %v1310 = vmax.f32 %v1286, 0.0
    %v1311 = vmax.f32 %v1287, 0.0
    %v1312 = vmax.f32 %v1288, 0.0
    %v1313 = vmax.f32 %v1289, 0.0
    %v1314 = vmax.f32 %v1290, 0.0
    %v1315 = vmax.f32 %v1291, 0.0
    %v1316 = vmax.f32 %v1292, 0.0
    %v1317 = vmax.f32 %v1293, 0.0
    %v1318 = vmax.f32 %v1294, 0.0
    %v1319 = vmax.f32 %v1295, 0.0
    %v1320 = vmax.f32 %v1296, 0.0
    %v1321 = vmax.f32 %v1297, 0.0
    %v1322 = vmax.f32 %v1298, 0.0
    %v1323 = vmax.f32 %v1299, 0.0
    %v1324 = vmax.f32 %v1300, 0.0
    %v1325 = vmax.f32 %v1301, 0.0
    %v1326 = vmax.f32 %v1302, 0.0
    %v1327 = vmax.f32 %v1303, 0.0
    %v1328 = vmax.f32 %v1304, 0.0
    %v1329 = vmax.f32 %v1305, 0.0
    %v1330 = vmax.f32 %v1306, 0.0
    %v1331 = vmax.f32 %v1307, 0.0
    %v1332 = vmax.f32 %v1308, 0.0
    %v1333 = vmax.f32 %v1309, 0.0
    %v1334 = vld [vmem:[#allocation2] sm:$0xff]
    %v1335 = vld [vmem:[#allocation2 + $0x8] sm:$0xff]
    %v1336 = vld [vmem:[#allocation2 + $0x10] sm:$0xff]
    %v1337 = vld [vmem:[#allocation2 + $0x18] sm:$0xff]
    %v1338 = vld [vmem:[#allocation2 + $0x20] sm:$0xff]
    %v1339 = vld [vmem:[#allocation2 + $0x28] sm:$0xff]
    %v1340 = vld [vmem:[#allocation2 + $0x30] sm:$0xff]
    %v1341 = vld [vmem:[#allocation2 + $0x38] sm:$0xff]
    %v1342 = vld [vmem:[#allocation2 + $0x40] sm:$0xff]
    %v1343 = vld [vmem:[#allocation2 + $0x48] sm:$0xff]
    %v1344 = vld [vmem:[#allocation2 + $0x50] sm:$0xff]
    %v1345 = vld [vmem:[#allocation2 + $0x58] sm:$0xff]
    %v1346 = vld [vmem:[#allocation2 + $0x60] sm:$0xff]
    %v1347 = vld [vmem:[#allocation2 + $0x68] sm:$0xff]
    %v1348 = vld [vmem:[#allocation2 + $0x70] sm:$0xff]
    %v1349 = vld [vmem:[#allocation2 + $0x78] sm:$0xff]
    %v1350 = vld [vmem:[#allocation2 + $0x80] sm:$0xff]
    %v1351 = vld [vmem:[#allocation2 + $0x88] sm:$0xff]
    %v1352 = vld [vmem:[#allocation2 + $0x90] sm:$0xff]
    %v1353 = vld [vmem:[#allocation2 + $0x98] sm:$0xff]
    %v1354 = vld [vmem:[#allocation2 + $0xa0] sm:$0xff]
    %v1355 = vld [vmem:[#allocation2 + $0xa8] sm:$0xff]
    %v1356 = vld [vmem:[#allocation2 + $0xb0] sm:$0xff]
    %v1357 = vld [vmem:[#allocation2 + $0xb8] sm:$0xf]
    %v1358 = vmul.f32 %v1310, %v1334
    %v1359 = vmul.f32 %v1311, %v1335
    %v1360 = vmul.f32 %v1312, %v1336
    %v1361 = vmul.f32 %v1313, %v1337
    %v1362 = vmul.f32 %v1314, %v1338
    %v1363 = vmul.f32 %v1315, %v1339
    %v1364 = vmul.f32 %v1316, %v1340
    %v1365 = vmul.f32 %v1317, %v1341
    %v1366 = vmul.f32 %v1318, %v1342
    %v1367 = vmul.f32 %v1319, %v1343
    %v1368 = vmul.f32 %v1320, %v1344
    %v1369 = vmul.f32 %v1321, %v1345
    %v1370 = vmul.f32 %v1322, %v1346
    %v1371 = vmul.f32 %v1323, %v1347
    %v1372 = vmul.f32 %v1324, %v1348
    %v1373 = vmul.f32 %v1325, %v1349
    %v1374 = vmul.f32 %v1326, %v1350
    %v1375 = vmul.f32 %v1327, %v1351
    %v1376 = vmul.f32 %v1328, %v1352
    %v1377 = vmul.f32 %v1329, %v1353
    %v1378 = vmul.f32 %v1330, %v1354
    %v1379 = vmul.f32 %v1331, %v1355
    %v1380 = vmul.f32 %v1332, %v1356
    %v1381 = vmul.f32 %v1333, %v1357
    %vm1382 = vcmask 1043456
    %v1383 = vsel %vm1382, %v1381, 0.0
    %v1384 = vmax.f32 %v1358, %v1359
    %v1385 = vmax.f32 %v1384, %v1360
    %v1386 = vrot.slane %v1385, 4
    %v1387 = vmax.f32 %v1385, %v1386
    %v1388 = vrot.slane %v1387, 2
    %v1389 = vmax.f32 %v1387, %v1388
    %v1390 = vrot.slane %v1389, 1
    %v1391 = vmax.f32 %v1389, %v1390
    %v1392 = vmax.f32 %v1361, %v1362
    %v1393 = vmax.f32 %v1392, %v1363
    %v1394 = vrot.slane %v1393, 4
    %v1395 = vmax.f32 %v1393, %v1394
    %v1396 = vrot.slane %v1395, 2
    %v1397 = vmax.f32 %v1395, %v1396
    %v1398 = vrot.slane %v1397, 1
    %v1399 = vmax.f32 %v1397, %v1398
    %v1400 = vmax.f32 %v1364, %v1365
    %v1401 = vmax.f32 %v1400, %v1366
    %v1402 = vrot.slane %v1401, 4
    %v1403 = vmax.f32 %v1401, %v1402
    %v1404 = vrot.slane %v1403, 2
    %v1405 = vmax.f32 %v1403, %v1404
    %v1406 = vrot.slane %v1405, 1
    %v1407 = vmax.f32 %v1405, %v1406
    %v1408 = vmax.f32 %v1367, %v1368
    %v1409 = vmax.f32 %v1408, %v1369
    %v1410 = vrot.slane %v1409, 4
    %v1411 = vmax.f32 %v1409, %v1410
    %v1412 = vrot.slane %v1411, 2
    %v1413 = vmax.f32 %v1411, %v1412
    %v1414 = vrot.slane %v1413, 1
    %v1415 = vmax.f32 %v1413, %v1414
    %v1416 = vmax.f32 %v1370, %v1371
    %v1417 = vmax.f32 %v1416, %v1372
    %v1418 = vrot.slane %v1417, 4
    %v1419 = vmax.f32 %v1417, %v1418
    %v1420 = vrot.slane %v1419, 2
    %v1421 = vmax.f32 %v1419, %v1420
    %v1422 = vrot.slane %v1421, 1
    %v1423 = vmax.f32 %v1421, %v1422
    %v1424 = vmax.f32 %v1373, %v1374
    %v1425 = vmax.f32 %v1424, %v1375
    %v1426 = vrot.slane %v1425, 4
    %v1427 = vmax.f32 %v1425, %v1426
    %v1428 = vrot.slane %v1427, 2
    %v1429 = vmax.f32 %v1427, %v1428
    %v1430 = vrot.slane %v1429, 1
    %v1431 = vmax.f32 %v1429, %v1430
    %v1432 = vmax.f32 %v1376, %v1377
    %v1433 = vmax.f32 %v1432, %v1378
    %v1434 = vrot.slane %v1433, 4
    %v1435 = vmax.f32 %v1433, %v1434
    %v1436 = vrot.slane %v1435, 2
    %v1437 = vmax.f32 %v1435, %v1436
    %v1438 = vrot.slane %v1437, 1
    %v1439 = vmax.f32 %v1437, %v1438
    %v1440 = vmax.f32 %v1379, %v1380
    %v1441 = vmax.f32 %v1440, %v1383
    %v1442 = vrot.slane %v1441, 4
    %v1443 = vmax.f32 %v1441, %v1442
    %v1444 = vrot.slane %v1443, 2
    %v1445 = vmax.f32 %v1443, %v1444
    %v1446 = vrot.slane %v1445, 1
    %v1447 = vmax.f32 %v1445, %v1446
    %vm1456 = vcmask 1041409
    %v1457 = vsel %vm1456, %v1399, %v1391
    %vm1458 = vcmask 1042434
    %v1459 = vsel %vm1458, %v1407, %v1457
    %vm1460 = vcmask 1043459
    %v1461 = vsel %vm1460, %v1415, %v1459
    %vm1462 = vcmask 1044484
    %v1463 = vsel %vm1462, %v1423, %v1461
    %vm1464 = vcmask 1045509
    %v1465 = vsel %vm1464, %v1431, %v1463
    %vm1466 = vcmask 1046534
    %v1467 = vsel %vm1466, %v1439, %v1465
    %vm1468 = vcmask 1047559
    %v1469 = vsel %vm1468, %v1447, %v1467
    %1471 = vst [vmem:[#allocation5] sm:$0xff] %v1469
    // Predicated region
    $region22: #{tpu_custom_call.1} parent=1 // pred_check
      _
    $region23: #{tpu_custom_call.1} parent=1 // pred_check_branch
      %1473 = sbr.rel (0) target = $region25
    $region24: #{tpu_custom_call.1} parent=1 // pred_region
      %s1475 = ssub.s32 128, 128
      %1476 = vsyncadd [#allocation4], %s1475
      %s1478 = sshll.u32 [#allocation5], 4
      %s1479 = int_to_ptr.vmem [resolvable:$true] %s1478
      %1481 = dma.vmem_to_hbm [thread:$0]  %s1479, 128, %s4, [#allocation4]
    $region25: #{tpu_custom_call.1} parent=1 // pred_fallthru
      _
    // Predicated region
    $region26: #{tpu_custom_call.1} parent=1 // pred_check
      _
    $region27: #{tpu_custom_call.1} parent=1 // pred_check_branch
      %1483 = sbr.rel (0) target = $region29
    $region28: #{tpu_custom_call.1} parent=1 // pred_region
      %1484 = dma.done [#allocation4], 128
    $region29: #{tpu_custom_call.1} parent=1 // pred_fallthru
      _
    %1485 = vsyncpa [#allocation3], 1
    %1486 = vsyncpa [#allocation4], 1

</llo_original>
